<compile_context>
chip_gen: v6e
topology: v6e:2x2x1
jax: 0.10.0
libtpu: 0.0.40
codegen_flags: <defaults>
</compile_context>

<pallas_src>
import numpy as np
import jax
import jax.numpy as jnp
from jax.experimental import pallas as pl
from jax.experimental.pallas import tpu as pltpu

SIGMA_DATA = 0.5


def _make_kernel(H, W, C, sigma_data):
    HW = H * W
    sd = float(sigma_data)
    sd2 = sd * sd

    def kernel(sigma_ref, x_ref, w_ref, bias_ref, embw_ref, cmask_ref,
               out_ref, taps_ref):
        b = pl.program_id(0)
        sigma = sigma_ref[b]                            # scalar (SMEM, prefetched)

        # EDM preconditioning coefficients (fp32, matching the torch code).
        denom = sigma * sigma + jnp.float32(sd2)
        root = jnp.sqrt(denom)
        c_skip = jnp.float32(sd2) / denom
        c_out = sigma * jnp.float32(sd) / root
        c_in = jnp.float32(1.0) / root
        c_noise = jnp.log(sigma) * jnp.float32(0.25)    # assumes sigma > 0 (EDM)

        x = x_ref[0]                                    # (C, HW), lane-dense

        # Hoisted weight scaling: fold c_out*c_in into the stacked conv weight
        # once (9*C*C elements) and fuse the three per-channel adds into one
        # c_out-scaled bias column (conv is linear, so this is exact).
        w_scaled = (c_out * c_in) * w_ref[...]          # (C, 9C)
        bias_eff = c_out * (bias_ref[...] + c_noise * embw_ref[...])   # (C, 1)

        # Hoisted dx boundary masking: two source-side column-masked copies of
        # x shared by all three dy variants of each dx != 0 tap (2 VPU passes
        # instead of 6).
        x_m = x * cmask_ref[0:1, :]                     # col W-1 zeroed -> dx = -1 taps
        x_p = x * cmask_ref[1:2, :]                     # col 0   zeroed -> dx = +1 taps

        # Build the stacked (9C, HW) conv operand in VMEM with XLU rolls
        # (no HBM-side padding, no im2col stream).
        for ky in range(3):
            dy = ky - 1
            for kx in range(3):
                dx = kx - 1
                k = ky * 3 + kx
                base = x if dx == 0 else (x_m if dx == -1 else x_p)
                off = dy * W + dx                       # flat source offset
                if off == 0:
                    tap = base
                else:
                    tap = pltpu.roll(base, shift=(-off) % HW, axis=1)
                taps_ref[k * C:(k + 1) * C, :] = tap

        # dy row-wrap fixup: the first W lanes of the dy=-1 taps and the last
        # W lanes of the dy=+1 taps are roll wrap-around garbage -> overwrite
        # with zeros (two tiny (3C, W) stores instead of 6 full VPU passes).
        zeros_margin = jnp.zeros((3 * C, W), jnp.float32)
        taps_ref[0:3 * C, 0:W] = zeros_margin
        taps_ref[6 * C:9 * C, HW - W:HW] = zeros_margin

        # One big-K MXU matmul: (C, 9C) @ (9C, HW), fp32 accumulate.
        conv = jnp.dot(w_scaled, taps_ref[...],
                       preferred_element_type=jnp.float32)

        # D_x = c_skip * x + c_out * F(c_in * x, c_noise)
        out_ref[0] = conv + (c_skip * x + bias_eff)

    return kernel


def edm_precond(x_nchw, sigma, params, sigma_data=SIGMA_DATA):
    """Forward pass of EDMPrecond with a synthetic conv model. x_nchw: (B,C,H,W)."""
    x_nchw = x_nchw.astype(jnp.float32)
    B, C, H, W = x_nchw.shape
    HW = H * W
    w4d, bias, emb_w, emb_b = params                   # (3,3,C,C), (C,), (C,), (C,)

    # handle_sigma semantics: scalar or per-batch tensor -> (B,) fp32 (SMEM).
    sigma = jnp.asarray(sigma, jnp.float32).reshape(-1)
    sigma = jnp.broadcast_to(sigma, (B,)).astype(jnp.float32)

    # Native NCHW, spatial flattened into the lane dim.  No wrapper pad pass:
    # all boundary handling happens in-VMEM (rolls + masks).
    x_flat = x_nchw.reshape(B, C, HW)

    # Stacked conv weights (C_out, 9*C_in): tap k = ky*3+kx occupies columns
    # [k*C, (k+1)*C), matching the (9C, HW) stacked-operand layout.
    w_t = jnp.transpose(w4d.astype(jnp.float32), (0, 1, 3, 2)).reshape(9, C, C)
    w_stack = jnp.transpose(w_t, (1, 0, 2)).reshape(C, 9 * C)
    bias_base = (bias + emb_b).astype(jnp.float32).reshape(C, 1)
    emb_w2 = emb_w.astype(jnp.float32).reshape(C, 1)

    # Source-side column masks (tiny, resident): row 0 zeroes col W-1 (used by
    # dx=-1 taps), row 1 zeroes col 0 (used by dx=+1 taps).
    col = np.arange(W, dtype=np.float32)
    cmask = jnp.asarray(np.stack([
        np.tile((col != W - 1).astype(np.float32), H),
        np.tile((col != 0).astype(np.float32), H),
    ]))

    flops = 2 * B * C * (9 * C) * HW + 8 * B * C * HW
    bytes_accessed = 4 * (2 * B * C * HW + 9 * C * C + 2 * HW + 3 * C)

    kernel = _make_kernel(H, W, C, sigma_data)
    out_flat = pl.pallas_call(
        kernel,
        out_shape=jax.ShapeDtypeStruct((B, C, HW), jnp.float32),
        grid_spec=pltpu.PrefetchScalarGridSpec(
            num_scalar_prefetch=1,                     # sigma lives in SMEM
            grid=(B,),
            in_specs=[
                pl.BlockSpec((1, C, HW), lambda b, s: (b, 0, 0)),    # x (flat)
                pl.BlockSpec((C, 9 * C), lambda b, s: (0, 0)),       # stacked weights
                pl.BlockSpec((C, 1), lambda b, s: (0, 0)),           # bias + emb_b
                pl.BlockSpec((C, 1), lambda b, s: (0, 0)),           # emb_w
                pl.BlockSpec((2, HW), lambda b, s: (0, 0)),          # dx source masks
            ],
            out_specs=pl.BlockSpec((1, C, HW), lambda b, s: (b, 0, 0)),
            scratch_shapes=[pltpu.VMEM((9 * C, HW), jnp.float32)],   # stacked taps
        ),
        compiler_params=pltpu.CompilerParams(
            dimension_semantics=("parallel",),
            vmem_limit_bytes=32 * 1024 * 1024),
        cost_estimate=pl.CostEstimate(flops=flops, transcendentals=2 * B,
                                      bytes_accessed=bytes_accessed),
    )(sigma, x_flat, w_stack, bias_base, emb_w2, cmask)

    return out_flat.reshape(B, C, H, W)


def reference_np(x_nchw, sigma, params, sigma_data=SIGMA_DATA):
    """Pure numpy (float64) reference of the same forward pass."""
    x = np.asarray(x_nchw, np.float64)
    B, C, H, W = x.shape
    w4d, bias, emb_w, emb_b = [np.asarray(p, np.float64) for p in params]
    sig = np.broadcast_to(np.asarray(sigma, np.float64).reshape(-1), (B,))
    s = sig.reshape(B, 1, 1, 1)
    sd2 = sigma_data ** 2
    c_skip = sd2 / (s ** 2 + sd2)
    c_out = s * sigma_data / np.sqrt(s ** 2 + sd2)
    c_in = 1.0 / np.sqrt(sd2 + s ** 2)
    c_noise = np.log(s) / 4.0

    xin = c_in * x
    xp = np.pad(xin, ((0, 0), (0, 0), (1, 1), (1, 1)))
    f = np.zeros_like(x)
    for dy in range(3):
        for dx in range(3):
            patch = xp[:, :, dy:dy + H, dx:dx + W]            # (B,C,H,W)
            f += np.einsum('bchw,cd->bdhw', patch, w4d[dy, dx])
    f = (f + bias.reshape(1, C, 1, 1)
           + c_noise * emb_w.reshape(1, C, 1, 1)
           + emb_b.reshape(1, C, 1, 1))
    return c_skip * x + c_out * f


if __name__ == "__main__":
    B, C, H, W = 2, 4, 16, 16

    key = jax.random.PRNGKey(0)
    kx, kw, kb, kew, keb = jax.random.split(key, 5)

    x = jax.random.normal(kx, (B, C, H, W), dtype=jnp.float32)
    sigma = jnp.array([0.3, 1.7], dtype=jnp.float32)   # per-batch noise levels

    # Deterministic synthetic model parameters (3x3 conv HWIO + noise embedding).
    w4d = 0.1 * jax.random.normal(kw, (3, 3, C, C), dtype=jnp.float32)
    bias = 0.05 * jax.random.normal(kb, (C,), dtype=jnp.float32)
    emb_w = 0.05 * jax.random.normal(kew, (C,), dtype=jnp.float32)
    emb_b = 0.05 * jax.random.normal(keb, (C,), dtype=jnp.float32)
    params = (w4d, bias, emb_w, emb_b)

    out = edm_precond(x, sigma, params)
    out = jax.block_until_ready(out)

    ref = reference_np(np.asarray(x), np.asarray(sigma),
                       tuple(np.asarray(p) for p in params))

    np.testing.assert_allclose(np.asarray(out), ref, atol=1e-4, rtol=1e-4)
    assert out.shape == (B, C, H, W) and out.dtype == jnp.float32
    print("KERNEL_OK")
</pallas_src>

<mosaic_0001>
module attributes {stable_mosaic.version = 11 : i64} {
  func.func @kernel(%arg0: i32, %arg1: memref<2xf32, #tpu.memory_space<smem>>, %arg2: memref<1x4x256xf32, #tpu.memory_space<vmem>>, %arg3: memref<4x36xf32, #tpu.memory_space<vmem>>, %arg4: memref<4x1xf32, #tpu.memory_space<vmem>>, %arg5: memref<4x1xf32, #tpu.memory_space<vmem>>, %arg6: memref<2x256xf32, #tpu.memory_space<vmem>>, %arg7: memref<1x4x256xf32, #tpu.memory_space<vmem>>, %arg8: memref<36x256xf32, #tpu.memory_space<vmem>>) attributes {dimension_semantics = [#tpu.dimension_semantics<parallel>], iteration_bounds = array<i64: 2>, scalar_prefetch = 1 : i64, scratch_operands = 1 : i64, tpu.core_type = #tpu.core_type<tc>, window_params = [{transform_indices = @transform_0, window_bounds = array<i64: 1, 4, 256>}, {pipeline_mode = #tpu.pipeline_mode<synchronous>, transform_indices = @transform_1, window_bounds = array<i64: 4, 36>}, {pipeline_mode = #tpu.pipeline_mode<synchronous>, transform_indices = @transform_2, window_bounds = array<i64: 4, 1>}, {pipeline_mode = #tpu.pipeline_mode<synchronous>, transform_indices = @transform_3, window_bounds = array<i64: 4, 1>}, {pipeline_mode = #tpu.pipeline_mode<synchronous>, transform_indices = @transform_4, window_bounds = array<i64: 2, 256>}, {transform_indices = @transform_5, window_bounds = array<i64: 1, 4, 256>}]} {
    %0 = arith.index_cast %arg0 : i32 to index
    %1 = memref.load %arg1[%0] : memref<2xf32, #tpu.memory_space<smem>>
    %2 = arith.mulf %1, %1 : f32
    %cst = arith.constant 2.500000e-01 : f32
    %3 = arith.addf %2, %cst : f32
    %4 = math.sqrt %3 : f32
    %cst_0 = arith.constant 2.500000e-01 : f32
    %5 = arith.divf %cst_0, %3 : f32
    %cst_1 = arith.constant 5.000000e-01 : f32
    %6 = arith.mulf %1, %cst_1 : f32
    %7 = arith.divf %6, %4 : f32
    %cst_2 = arith.constant 1.000000e+00 : f32
    %8 = arith.divf %cst_2, %4 : f32
    %9 = math.log %1 : f32
    %cst_3 = arith.constant 2.500000e-01 : f32
    %10 = arith.mulf %9, %cst_3 : f32
    %c0 = arith.constant 0 : index
    %c0_4 = arith.constant 0 : index
    %c0_5 = arith.constant 0 : index
    %11 = vector.load %arg2[%c0, %c0_4, %c0_5] : memref<1x4x256xf32, #tpu.memory_space<vmem>>, vector<1x4x256xf32>
    %12 = vector.shape_cast %11 : vector<1x4x256xf32> to vector<4x256xf32>
    %13 = arith.mulf %7, %8 : f32
    %c0_6 = arith.constant 0 : index
    %c0_7 = arith.constant 0 : index
    %14 = vector.load %arg3[%c0_6, %c0_7] : memref<4x36xf32, #tpu.memory_space<vmem>>, vector<4x36xf32>
    %15 = vector.broadcast %13 : f32 to vector<4x36xf32>
    %16 = arith.mulf %15, %14 : vector<4x36xf32>
    %c0_8 = arith.constant 0 : index
    %c0_9 = arith.constant 0 : index
    %17 = vector.load %arg4[%c0_8, %c0_9] : memref<4x1xf32, #tpu.memory_space<vmem>>, vector<4x1xf32>
    %c0_10 = arith.constant 0 : index
    %c0_11 = arith.constant 0 : index
    %18 = vector.load %arg5[%c0_10, %c0_11] : memref<4x1xf32, #tpu.memory_space<vmem>>, vector<4x1xf32>
    %19 = vector.broadcast %10 : f32 to vector<4x1xf32>
    %20 = arith.mulf %19, %18 : vector<4x1xf32>
    %21 = arith.addf %17, %20 : vector<4x1xf32>
    %22 = vector.broadcast %7 : f32 to vector<4x1xf32>
    %23 = arith.mulf %22, %21 : vector<4x1xf32>
    %c0_12 = arith.constant 0 : index
    %c0_13 = arith.constant 0 : index
    %24 = vector.load %arg6[%c0_12, %c0_13] : memref<2x256xf32, #tpu.memory_space<vmem>>, vector<1x256xf32>
    %25 = vector.broadcast %24 : vector<1x256xf32> to vector<4x256xf32>
    %26 = arith.mulf %12, %25 : vector<4x256xf32>
    %c1 = arith.constant 1 : index
    %c0_14 = arith.constant 0 : index
    %27 = vector.load %arg6[%c1, %c0_14] : memref<2x256xf32, #tpu.memory_space<vmem>>, vector<1x256xf32>
    %28 = vector.broadcast %27 : vector<1x256xf32> to vector<4x256xf32>
    %29 = arith.mulf %12, %28 : vector<4x256xf32>
    %c17_i32 = arith.constant 17 : i32
    %30 = tpu.dynamic_rotate %26 by %c17_i32 dim 1 : vector<4x256xf32>, i32 -> vector<4x256xf32>
    %c0_15 = arith.constant 0 : index
    %c0_16 = arith.constant 0 : index
    %31 = vector.load %arg8[%c0_15, %c0_16] : memref<36x256xf32, #tpu.memory_space<vmem>>, vector<4x256xf32>
    tpu.vector_store %arg8[%c0_15, %c0_16], %30 {strides = array<i32>} : memref<36x256xf32, #tpu.memory_space<vmem>>, vector<4x256xf32>,
    %c16_i32 = arith.constant 16 : i32
    %32 = tpu.dynamic_rotate %12 by %c16_i32 dim 1 : vector<4x256xf32>, i32 -> vector<4x256xf32>
    %c4 = arith.constant 4 : index
    %c0_17 = arith.constant 0 : index
    %33 = vector.load %arg8[%c4, %c0_17] : memref<36x256xf32, #tpu.memory_space<vmem>>, vector<4x256xf32>
    tpu.vector_store %arg8[%c4, %c0_17], %32 {strides = array<i32>} : memref<36x256xf32, #tpu.memory_space<vmem>>, vector<4x256xf32>,
    %c15_i32 = arith.constant 15 : i32
    %34 = tpu.dynamic_rotate %29 by %c15_i32 dim 1 : vector<4x256xf32>, i32 -> vector<4x256xf32>
    %c8 = arith.constant 8 : index
    %c0_18 = arith.constant 0 : index
    %35 = vector.load %arg8[%c8, %c0_18] : memref<36x256xf32, #tpu.memory_space<vmem>>, vector<4x256xf32>
    tpu.vector_store %arg8[%c8, %c0_18], %34 {strides = array<i32>} : memref<36x256xf32, #tpu.memory_space<vmem>>, vector<4x256xf32>,
    %c1_i32 = arith.constant 1 : i32
    %36 = tpu.dynamic_rotate %26 by %c1_i32 dim 1 : vector<4x256xf32>, i32 -> vector<4x256xf32>
    %c12 = arith.constant 12 : index
    %c0_19 = arith.constant 0 : index
    %37 = vector.load %arg8[%c12, %c0_19] : memref<36x256xf32, #tpu.memory_space<vmem>>, vector<4x256xf32>
    tpu.vector_store %arg8[%c12, %c0_19], %36 {strides = array<i32>} : memref<36x256xf32, #tpu.memory_space<vmem>>, vector<4x256xf32>,
    %c16 = arith.constant 16 : index
    %c0_20 = arith.constant 0 : index
    %38 = vector.load %arg8[%c16, %c0_20] : memref<36x256xf32, #tpu.memory_space<vmem>>, vector<4x256xf32>
    tpu.vector_store %arg8[%c16, %c0_20], %12 {strides = array<i32>} : memref<36x256xf32, #tpu.memory_space<vmem>>, vector<4x256xf32>,
    %c255_i32 = arith.constant 255 : i32
    %39 = tpu.dynamic_rotate %29 by %c255_i32 dim 1 : vector<4x256xf32>, i32 -> vector<4x256xf32>
    %c20 = arith.constant 20 : index
    %c0_21 = arith.constant 0 : index
    %40 = vector.load %arg8[%c20, %c0_21] : memref<36x256xf32, #tpu.memory_space<vmem>>, vector<4x256xf32>
    tpu.vector_store %arg8[%c20, %c0_21], %39 {strides = array<i32>} : memref<36x256xf32, #tpu.memory_space<vmem>>, vector<4x256xf32>,
    %c241_i32 = arith.constant 241 : i32
    %41 = tpu.dynamic_rotate %26 by %c241_i32 dim 1 : vector<4x256xf32>, i32 -> vector<4x256xf32>
    %c24 = arith.constant 24 : index
    %c0_22 = arith.constant 0 : index
    %42 = vector.load %arg8[%c24, %c0_22] : memref<36x256xf32, #tpu.memory_space<vmem>>, vector<4x256xf32>
    tpu.vector_store %arg8[%c24, %c0_22], %41 {strides = array<i32>} : memref<36x256xf32, #tpu.memory_space<vmem>>, vector<4x256xf32>,
    %c240_i32 = arith.constant 240 : i32
    %43 = tpu.dynamic_rotate %12 by %c240_i32 dim 1 : vector<4x256xf32>, i32 -> vector<4x256xf32>
    %c28 = arith.constant 28 : index
    %c0_23 = arith.constant 0 : index
    %44 = vector.load %arg8[%c28, %c0_23] : memref<36x256xf32, #tpu.memory_space<vmem>>, vector<4x256xf32>
    tpu.vector_store %arg8[%c28, %c0_23], %43 {strides = array<i32>} : memref<36x256xf32, #tpu.memory_space<vmem>>, vector<4x256xf32>,
    %c239_i32 = arith.constant 239 : i32
    %45 = tpu.dynamic_rotate %29 by %c239_i32 dim 1 : vector<4x256xf32>, i32 -> vector<4x256xf32>
    %c32 = arith.constant 32 : index
    %c0_24 = arith.constant 0 : index
    %46 = vector.load %arg8[%c32, %c0_24] : memref<36x256xf32, #tpu.memory_space<vmem>>, vector<4x256xf32>
    tpu.vector_store %arg8[%c32, %c0_24], %45 {strides = array<i32>} : memref<36x256xf32, #tpu.memory_space<vmem>>, vector<4x256xf32>,
    %cst_25 = arith.constant 0.000000e+00 : f32
    %47 = vector.broadcast %cst_25 : f32 to vector<12x16xf32>
    %c0_26 = arith.constant 0 : index
    %c0_27 = arith.constant 0 : index
    %48 = vector.load %arg8[%c0_26, %c0_27] : memref<36x256xf32, #tpu.memory_space<vmem>>, vector<12x16xf32>
    tpu.vector_store %arg8[%c0_26, %c0_27], %47 {strides = array<i32>} : memref<36x256xf32, #tpu.memory_space<vmem>>, vector<12x16xf32>,
    %c24_28 = arith.constant 24 : index
    %c240 = arith.constant 240 : index
    %49 = vector.load %arg8[%c24_28, %c240] : memref<36x256xf32, #tpu.memory_space<vmem>>, vector<12x16xf32>
    tpu.vector_store %arg8[%c24_28, %c240], %47 {strides = array<i32>} : memref<36x256xf32, #tpu.memory_space<vmem>>, vector<12x16xf32>,
    %c0_29 = arith.constant 0 : index
    %c0_30 = arith.constant 0 : index
    %50 = vector.load %arg8[%c0_29, %c0_30] : memref<36x256xf32, #tpu.memory_space<vmem>>, vector<36x256xf32>
    %cst_31 = arith.constant dense<0.000000e+00> : vector<4x256xf32>
    %51 = tpu.matmul %16, %50, %cst_31 {dimension_numbers = #tpu.dot_dimension_numbers<[1], [0], [0], [1], [0, 0, 1, 1], [], []>} : vector<4x36xf32>, vector<36x256xf32>, vector<4x256xf32> -> vector<4x256xf32>
    %52 = vector.broadcast %5 : f32 to vector<4x256xf32>
    %53 = arith.mulf %52, %12 : vector<4x256xf32>
    %54 = vector.broadcast %23 : vector<4x1xf32> to vector<4x256xf32>
    %55 = arith.addf %53, %54 : vector<4x256xf32>
    %56 = arith.addf %51, %55 : vector<4x256xf32>
    %c0_32 = arith.constant 0 : index
    %c0_33 = arith.constant 0 : index
    %c0_34 = arith.constant 0 : index
    %57 = vector.load %arg7[%c0_32, %c0_33, %c0_34] : memref<1x4x256xf32, #tpu.memory_space<vmem>>, vector<1x4x256xf32>
    %58 = vector.shape_cast %57 : vector<1x4x256xf32> to vector<4x256xf32>
    %59 = vector.shape_cast %56 : vector<4x256xf32> to vector<1x4x256xf32>
    tpu.vector_store %arg7[%c0_32, %c0_33, %c0_34], %59 {strides = array<i32>} : memref<1x4x256xf32, #tpu.memory_space<vmem>>, vector<1x4x256xf32>,
    return
  }
  func.func @transform_0(%arg0: i32, %arg1: memref<2xf32, #tpu.memory_space<smem>>) -> (i32, i32, i32) {
    %c0_i32 = arith.constant 0 : i32
    %c0_i32_0 = arith.constant 0 : i32
    %c0_i32_1 = arith.constant 0 : i32
    return %arg0, %c0_i32, %c0_i32_0 : i32, i32, i32
  }
  func.func @transform_1(%arg0: i32, %arg1: memref<2xf32, #tpu.memory_space<smem>>) -> (i32, i32) {
    %c0_i32 = arith.constant 0 : i32
    %c0_i32_0 = arith.constant 0 : i32
    %c0_i32_1 = arith.constant 0 : i32
    return %c0_i32, %c0_i32_0 : i32, i32
  }
  func.func @transform_2(%arg0: i32, %arg1: memref<2xf32, #tpu.memory_space<smem>>) -> (i32, i32) {
    %c0_i32 = arith.constant 0 : i32
    %c0_i32_0 = arith.constant 0 : i32
    %c0_i32_1 = arith.constant 0 : i32
    return %c0_i32, %c0_i32_0 : i32, i32
  }
  func.func @transform_3(%arg0: i32, %arg1: memref<2xf32, #tpu.memory_space<smem>>) -> (i32, i32) {
    %c0_i32 = arith.constant 0 : i32
    %c0_i32_0 = arith.constant 0 : i32
    %c0_i32_1 = arith.constant 0 : i32
    return %c0_i32, %c0_i32_0 : i32, i32
  }
  func.func @transform_4(%arg0: i32, %arg1: memref<2xf32, #tpu.memory_space<smem>>) -> (i32, i32) {
    %c0_i32 = arith.constant 0 : i32
    %c0_i32_0 = arith.constant 0 : i32
    %c0_i32_1 = arith.constant 0 : i32
    return %c0_i32, %c0_i32_0 : i32, i32
  }
  func.func @transform_5(%arg0: i32, %arg1: memref<2xf32, #tpu.memory_space<smem>>) -> (i32, i32, i32) {
    %c0_i32 = arith.constant 0 : i32
    %c0_i32_0 = arith.constant 0 : i32
    %c0_i32_1 = arith.constant 0 : i32
    return %arg0, %c0_i32, %c0_i32_0 : i32, i32, i32
  }
}

</mosaic_0001>

<llo_original>
// kernel: tpu_custom_call.1
$region0: #{tpu_custom_call.1}
  #allocation0 [shape = 'u32[]', space=smem, size = 0x4, offset = 0x4, fixed_abs, tag = 'smem constant byte address 0x4 - core index']
  #allocation1 [shape = 'u32[144,128]{1,0:T(1,128)}', space=vmem, size = 0x12000, scoped, tag = 'internal scratch']
  #allocation2 [shape = 'f32[36,256]{1,0:T(8,128)}', space=vmem, size = 0xa000, scoped, tag = 'scratch operand']
  #allocation3 [shape = 's32[1]{0}', space=sflag, size = 0x4, scoped, tag = 'scoped memory for tpu_custom_call.1']
  #allocation4 [shape = 'u8[512]{0}', space=smem, size = 0x200, scoped, tag = 'prefetched SMEM operand 0']
  %s0 = inlined_call_operand.vmem [shape: f32[2], index: 0, kind: input, shape index: {}]
  %s1 = inlined_call_operand.hbm [shape: f32[2,4,256], index: 1, kind: input, shape index: {}]
  %s2 = inlined_call_operand.vmem [shape: f32[4,36], index: 2, kind: input, shape index: {}]
  %s3 = inlined_call_operand.vmem [shape: f32[4,1], index: 3, kind: input, shape index: {}]
  %s4 = inlined_call_operand.vmem [shape: f32[4,1], index: 4, kind: input, shape index: {}]
  %s5 = inlined_call_operand.vmem [shape: f32[2,256], index: 5, kind: input, shape index: {}]
  %s6 = inlined_call_operand.hbm [shape: f32[2,4,256], index: 6, kind: output, shape index: {}]
  %s7 = sld [smem:[#allocation0]]
  $region57: #{tpu_custom_call.1} parent=0
    _
  %s9 = ssub.s32 1, %s7
  %s10 = scalar_select 0, %s9, %s7
  %s11 = sshll.u32 %s0, 4
  %s12 = int_to_ptr.vmem [resolvable:$true] %s11
  %14 = dma.vmem_to_smem %s12, 16, [#allocation4], [#allocation3]
  %15 = dma.done [#allocation3], 16
  %16 = sfence
  $region1: #{tpu_custom_call.1} parent=0
    #allocation5 [shape = 'u8[8192]{0}', space=vmem, size = 0x2000, scoped, tag = 'input window, operand 1']
    #allocation6 [shape = 's32[2]{0}', space=sflag, size = 0x8, scoped, tag = 'scoped memory for tpu_custom_call.1']
    #allocation7 [shape = 's32[2]{0}', space=sflag, size = 0x8, scoped, tag = 'scoped memory for tpu_custom_call.1']
    #allocation8 [shape = 'u8[8192]{0}', space=vmem, size = 0x2000, scoped, tag = 'output window, operand 0']
    %17 = vsyncpa [#allocation6], 0
    %s18 = scalar_lea.sflag [#allocation6], 1
    %19 = vsyncpa %s18, 0
    %20 = vsyncpa [#allocation7], 0
    %s21 = scalar_lea.sflag [#allocation7], 1
    %22 = vsyncpa %s21, 0
    loop: start=0, step=1, limit=4
    $region2: #{tpu_custom_call.1} parent=1 // loop_pre_header
      _
    $region3: #{tpu_custom_call.1} parent=1 // loop_header
      %s24 = sphi 0, %s28
      %p25 = scmp.ge.s32.totalorder %s24, 4
      %s34 = sphi 0, %s36
      %s37 = sphi 0, %s34
      %s38 = sphi 0, %s37
      %s54 = sphi 0, %s38
      %s58 = sphi 0, %s58
      %s60 = sphi 0, %s58
      %s61 = sphi 0, %s60
      %s75 = sphi 0, %s61
      %s79 = sphi 0, %s79
      %s81 = sphi 0, %s79
      %s82 = sphi 0, %s81
      %s96 = sphi 0, %s82
      %s100 = sphi 0, %s100
      %s102 = sphi 0, %s100
      %s103 = sphi 0, %s102
      %s117 = sphi 0, %s103
      %s121 = sphi 0, %s121
      %s123 = sphi 0, %s121
      %s124 = sphi 0, %s123
      %s138 = sphi 0, %s124
      %s144 = sphi 0, %s146
      %s147 = sphi 0, %s144
      %s148 = sphi 0, %s147
      %s164 = sphi 0, %s148
    $region4: #{tpu_custom_call.1} parent=1 // loop_header_branch
      %27 = sbr.rel (%p25) target = $region8
    $region5: #{tpu_custom_call.1} parent=1 // loop_body
      %s29 = ssub.s32 %s24, 1
      %s30 = ssub.s32 %s24, 2
      %s31 = sadd.s32 %s24, 1
      %s32 = ssub.s32 %s24, %s31
      %p33 = scmp.eq.s32.totalorder %s32, 0
      %s35 = sadd.s32 %s34, 1
      %s36 = scalar_select %p33, %s34, %s35
      %p39 = pneg %p33
      %p40 = scmp.eq.s32.totalorder %s24, 1
      %p41 = por %p39, %p40
      %p42 = scmp.ne.s32.totalorder %s34, %s37
      %p43 = scmp.eq.s32.totalorder %s24, 0
      %p44 = por %p42, %p43
      %p45 = scmp.ne.s32.totalorder %s34, %s37
      %p46 = scmp.eq.s32.totalorder %s29, 1
      %p47 = por %p45, %p46
      %p48 = scmp.ne.s32.totalorder %s37, %s38
      %p49 = scmp.eq.s32.totalorder %s29, 0
      %p50 = por %p48, %p49
      %p51 = scmp.ne.s32.totalorder %s37, %s38
      %p52 = scmp.eq.s32.totalorder %s30, 1
      %p53 = por %p51, %p52
      %p55 = scmp.ne.s32.totalorder %s38, %s54
      %p56 = scmp.eq.s32.totalorder %s30, 0
      %p57 = por %p55, %p56
      %s59 = sadd.s32 %s58, 1
      %p62 = scmp.eq.s32.totalorder %s24, 1
      %p63 = scmp.ne.s32.totalorder %s58, %s60
      %p64 = scmp.eq.s32.totalorder %s24, 0
      %p65 = por %p63, %p64
      %p66 = scmp.ne.s32.totalorder %s58, %s60
      %p67 = scmp.eq.s32.totalorder %s29, 1
      %p68 = por %p66, %p67
      %p69 = scmp.ne.s32.totalorder %s60, %s61
      %p70 = scmp.eq.s32.totalorder %s29, 0
      %p71 = por %p69, %p70
      %p72 = scmp.ne.s32.totalorder %s60, %s61
      %p73 = scmp.eq.s32.totalorder %s30, 1
      %p74 = por %p72, %p73
      %p76 = scmp.ne.s32.totalorder %s61, %s75
      %p77 = scmp.eq.s32.totalorder %s30, 0
      %p78 = por %p76, %p77
      %s80 = sadd.s32 %s79, 1
      %p83 = scmp.eq.s32.totalorder %s24, 1
      %p84 = scmp.ne.s32.totalorder %s79, %s81
      %p85 = scmp.eq.s32.totalorder %s24, 0
      %p86 = por %p84, %p85
      %p87 = scmp.ne.s32.totalorder %s79, %s81
      %p88 = scmp.eq.s32.totalorder %s29, 1
      %p89 = por %p87, %p88
      %p90 = scmp.ne.s32.totalorder %s81, %s82
      %p91 = scmp.eq.s32.totalorder %s29, 0
      %p92 = por %p90, %p91
      %p93 = scmp.ne.s32.totalorder %s81, %s82
      %p94 = scmp.eq.s32.totalorder %s30, 1
      %p95 = por %p93, %p94
      %p97 = scmp.ne.s32.totalorder %s82, %s96
      %p98 = scmp.eq.s32.totalorder %s30, 0
      %p99 = por %p97, %p98
      %s101 = sadd.s32 %s100, 1
      %p104 = scmp.eq.s32.totalorder %s24, 1
      %p105 = scmp.ne.s32.totalorder %s100, %s102
      %p106 = scmp.eq.s32.totalorder %s24, 0
      %p107 = por %p105, %p106
      %p108 = scmp.ne.s32.totalorder %s100, %s102
      %p109 = scmp.eq.s32.totalorder %s29, 1
      %p110 = por %p108, %p109
      %p111 = scmp.ne.s32.totalorder %s102, %s103
      %p112 = scmp.eq.s32.totalorder %s29, 0
      %p113 = por %p111, %p112
      %p114 = scmp.ne.s32.totalorder %s102, %s103
      %p115 = scmp.eq.s32.totalorder %s30, 1
      %p116 = por %p114, %p115
      %p118 = scmp.ne.s32.totalorder %s103, %s117
      %p119 = scmp.eq.s32.totalorder %s30, 0
      %p120 = por %p118, %p119
      %s122 = sadd.s32 %s121, 1
      %p125 = scmp.eq.s32.totalorder %s24, 1
      %p126 = scmp.ne.s32.totalorder %s121, %s123
      %p127 = scmp.eq.s32.totalorder %s24, 0
      %p128 = por %p126, %p127
      %p129 = scmp.ne.s32.totalorder %s121, %s123
      %p130 = scmp.eq.s32.totalorder %s29, 1
      %p131 = por %p129, %p130
      %p132 = scmp.ne.s32.totalorder %s123, %s124
      %p133 = scmp.eq.s32.totalorder %s29, 0
      %p134 = por %p132, %p133
      %p135 = scmp.ne.s32.totalorder %s123, %s124
      %p136 = scmp.eq.s32.totalorder %s30, 1
      %p137 = por %p135, %p136
      %p139 = scmp.ne.s32.totalorder %s124, %s138
      %p140 = scmp.eq.s32.totalorder %s30, 0
      %p141 = por %p139, %p140
      %s142 = ssub.s32 %s24, %s31
      %p143 = scmp.eq.s32.totalorder %s142, 0
      %s145 = sadd.s32 %s144, 1
      %s146 = scalar_select %p143, %s144, %s145
      %p149 = pneg %p143
      %p150 = scmp.eq.s32.totalorder %s24, 1
      %p151 = por %p149, %p150
      %p152 = scmp.ne.s32.totalorder %s144, %s147
      %p153 = scmp.eq.s32.totalorder %s24, 0
      %p154 = por %p152, %p153
      %p155 = scmp.ne.s32.totalorder %s144, %s147
      %p156 = scmp.eq.s32.totalorder %s29, 1
      %p157 = por %p155, %p156
      %p158 = scmp.ne.s32.totalorder %s147, %s148
      %p159 = scmp.eq.s32.totalorder %s29, 0
      %p160 = por %p158, %p159
      %p161 = scmp.ne.s32.totalorder %s147, %s148
      %p162 = scmp.eq.s32.totalorder %s30, 1
      %p163 = por %p161, %p162
      %p165 = scmp.ne.s32.totalorder %s148, %s164
      %p166 = scmp.eq.s32.totalorder %s30, 0
      %p167 = por %p165, %p166
      %p168 = scmp.le.s32.totalorder 1, %s24
      %p169 = scmp.lt.s32.totalorder %s24, 3
      %p170 = pnand %p168, %p169
      %p171 = pneg %p170
      // Predicated region
      $region9: #{tpu_custom_call.1} parent=5 // pred_check
        _
      $region10: #{tpu_custom_call.1} parent=5 // pred_check_branch
        %173 = sbr.rel (%p170) target = $region12
      $region11: #{tpu_custom_call.1} parent=5 // pred_region
        %s174 = ssub.s32 %s24, 1
        // Predicated region
        $region13: #{tpu_custom_call.1} parent=11 // pred_check
          %p175 = pneg %p71
        $region14: #{tpu_custom_call.1} parent=11 // pred_check_branch
          %177 = sbr.rel (%p175) target = $region16
        $region15: #{tpu_custom_call.1} parent=11 // pred_region
          _
        $region16: #{tpu_custom_call.1} parent=11 // pred_fallthru
          _
        // Predicated region
        $region17: #{tpu_custom_call.1} parent=11 // pred_check
          %p178 = pneg %p92
        $region18: #{tpu_custom_call.1} parent=11 // pred_check_branch
          %180 = sbr.rel (%p178) target = $region20
        $region19: #{tpu_custom_call.1} parent=11 // pred_region
          _
        $region20: #{tpu_custom_call.1} parent=11 // pred_fallthru
          _
        // Predicated region
        $region21: #{tpu_custom_call.1} parent=11 // pred_check
          %p181 = pneg %p113
        $region22: #{tpu_custom_call.1} parent=11 // pred_check_branch
          %183 = sbr.rel (%p181) target = $region24
        $region23: #{tpu_custom_call.1} parent=11 // pred_region
          _
        $region24: #{tpu_custom_call.1} parent=11 // pred_fallthru
          _
        // Predicated region
        $region25: #{tpu_custom_call.1} parent=11 // pred_check
          %p184 = pneg %p134
        $region26: #{tpu_custom_call.1} parent=11 // pred_check_branch
          %186 = sbr.rel (%p184) target = $region28
        $region27: #{tpu_custom_call.1} parent=11 // pred_region
          _
        $region28: #{tpu_custom_call.1} parent=11 // pred_fallthru
          _
      $region12: #{tpu_custom_call.1} parent=5 // pred_fallthru
        _
      %p187 = scmp.lt.s32.totalorder %s24, 2
      // Predicated region
      $region29: #{tpu_custom_call.1} parent=5 // pred_check
        %p188 = pneg %p187
      $region30: #{tpu_custom_call.1} parent=5 // pred_check_branch
        %190 = sbr.rel (%p188) target = $region32
      $region31: #{tpu_custom_call.1} parent=5 // pred_region
        // Predicated region
        $region33: #{tpu_custom_call.1} parent=31 // pred_check
          %p191 = pneg %p44
        $region34: #{tpu_custom_call.1} parent=31 // pred_check_branch
          %193 = sbr.rel (%p191) target = $region36
        $region35: #{tpu_custom_call.1} parent=31 // pred_region
          %s194 = sand.u32 %s34, 1
          %s195 = scalar_lea.sflag [#allocation6], %s194
          %s196 = sand.u32 %s34, 1
          %s197 = smul.addr %s196, 8
          %s198 = scalar_lea.vmem [#allocation5], %s197
          %s200 = ssub.s32 128, 128
          %201 = vsyncadd %s195, %s200
          %s202 = smul.addr %s24, 2
          %s203 = smul.addr %s202, 64
          %s204 = scalar_lea.hbm %s1, %s203
          %s206 = sshll.u32 %s198, 4
          %s207 = int_to_ptr.vmem [resolvable:$true] %s206
          %209 = dma.hbm_to_vmem [thread:$0]  %s204, 128, %s207, %s195
        $region36: #{tpu_custom_call.1} parent=31 // pred_fallthru
          _
      $region32: #{tpu_custom_call.1} parent=5 // pred_fallthru
        _
      %p210 = scmp.le.s32.totalorder 1, %s24
      %p211 = scmp.lt.s32.totalorder %s24, 3
      %p212 = pnand %p210, %p211
      %p213 = pneg %p212
      // Predicated region
      $region37: #{tpu_custom_call.1} parent=5 // pred_check
        _
      $region38: #{tpu_custom_call.1} parent=5 // pred_check_branch
        %215 = sbr.rel (%p212) target = $region40
      $region39: #{tpu_custom_call.1} parent=5 // pred_region
        %s216 = ssub.s32 %s24, 1
        %s217 = sand.u32 %s37, 1
        %s218 = scalar_lea.sflag [#allocation6], %s217
        %s219 = sand.u32 %s37, 1
        %s220 = smul.addr %s219, 8
        %s221 = scalar_lea.vmem [#allocation5], %s220
        // Predicated region
        $region41: #{tpu_custom_call.1} parent=39 // pred_check
          %p222 = pneg %p50
        $region42: #{tpu_custom_call.1} parent=39 // pred_check_branch
          %224 = sbr.rel (%p222) target = $region44
        $region43: #{tpu_custom_call.1} parent=39 // pred_region
          %225 = dma.done %s218, 128
        $region44: #{tpu_custom_call.1} parent=39 // pred_fallthru
          _
        %s226 = sand.u32 %s37, 1
        %s227 = scalar_lea.sflag [#allocation6], %s226
        %s228 = sand.u32 %s37, 1
        %s229 = smul.addr %s228, 8
        %s230 = scalar_lea.vmem [#allocation5], %s229
        %p231 = pneg %p50
        %p232 = pneg %p47
        %p233 = pneg %p71
        %p234 = pneg %p68
        %p235 = pneg %p92
        %p236 = pneg %p89
        %p237 = pneg %p113
        %p238 = pneg %p110
        %p239 = pneg %p134
        %p240 = pneg %p131
        %p241 = pneg %p160
        %p242 = pneg %p157
        %s243 = sand.u32 %s147, 1
        %s244 = scalar_lea.sflag [#allocation7], %s243
        %s245 = sand.u32 %s147, 1
        %s246 = smul.addr %s245, 8
        %s247 = scalar_lea.vmem [#allocation8], %s246
        %s248 = sld [smem:[#allocation4 + %s29]]
        %s249 = smul.f32 %s248, %s248
        %s250 = sadd.f32 %s249, 0.25
        %v251 = vstv %s250
        %v252 = vrsqrt.pop %v251
        %v253 = vmul.f32 %v251, %v252
        %vm254 = vcmp.eq.f32.partialorder %v251, inf
        %v255 = vsel %vm254, %v251, %v253
        %vm256 = vcmp.eq.f32.partialorder %v251, 0.0
        %v257 = vand.u32 %v251, 2147483648
        %v258 = vsel %vm256, %v257, %v255
        %s259 = vtos %v258
        %v260 = vstv %s250
        %v261 = vrcp.pop %v260
        %s262 = vtos %v261
        %s263 = smul.f32 0.25, %s262
        %s264 = smul.f32 %s248, 0.5
        %v265 = vstv %s259
        %v266 = vrcp.pop %v265
        %s267 = vtos %v266
        %s268 = smul.f32 %s264, %s267
        %v269 = vstv %s259
        %v270 = vrcp.pop %v269
        %s271 = vtos %v270
        %v272 = vstv %s248
        %v273 = vlog2.pop %v272
        %v274 = vmul.f32 %v273, 0.6931472
        %s275 = vtos %v274
        %s276 = smul.f32 %s275, 0.25
        %v277 = vld [vmem:[%s221] sm:$0xff]
        %s278 = smul.f32 %s268, %s271
        %v279 = vld [vmem:[%s2] sm:$0xf]
        %v280 = vstv %s278
        %v281 = vmul.f32 %v280, %v279
        %v282 = vld [vmem:[%s3] sm:$0xf]
        %v283 = vld [vmem:[%s4] sm:$0xf]
        %v284 = vstv %s276
        %v285 = vmul.f32 %v284, %v283
        %v286 = vadd.f32 %v282, %v285
        %v287 = vstv %s268
        %v288 = vmul.f32 %v287, %v286
        %v289 = vld [vmem:[%s5] ss:$2 sm:$0x3]
        %v291 = vlaneseq
        %v292 = vshrl.u32 %v291, 7
        %v293 = vsub.s32 0, %v292
        %v294 = vrot.slane %v289, %v293
        %v295 = vlaneseq
        %v296 = vshrl.u32 %v295, 7
        %v297 = vsub.s32 1, %v296
        %v298 = vrot.slane %v289, %v297
        %v299 = vcombine.low %v294, %v298
        %v301 = vmul.f32 %v277, %v299
        %s302 = scalar_lea.vmem %s5, 1
        %v303 = vld [vmem:[%s302] ss:$2 sm:$0x3]
        %v305 = vlaneseq
        %v306 = vshrl.u32 %v305, 7
        %v307 = vsub.s32 0, %v306
        %v308 = vrot.slane %v303, %v307
        %v309 = vlaneseq
        %v310 = vshrl.u32 %v309, 7
        %v311 = vsub.s32 1, %v310
        %v312 = vrot.slane %v303, %v311
        %v313 = vcombine.low %v308, %v312
        %v315 = vmul.f32 %v277, %v313
        %v317 = vcombine.high %v301, %v301
        %319 = vrot.lane.b32.xlu0 %v301, 17
        %v320 = vpop.permute.xlu0 %319
        %321 = vrot.lane.b32.xlu0 %v317, 17
        %v322 = vpop.permute.xlu0 %321
        %v323 = vlaneseq
        %v324 = vand.u32 %v323, 127
        %vm325 = vcmp.lt.s32.totalorder %v324, 17
        %v326 = vsel %vm325, %v320, %v322
        %v327 = vsel %vm325, %v322, %v320
        %328 = vst [vmem:[#allocation2] sm:$0xf] %v327
        %329 = vst [vmem:[#allocation2 + $0x8] sm:$0xf] %v326
        %v331 = vcombine.high %v277, %v277
        %333 = vrot.lane.b32.xlu0 %v277, 16
        %v334 = vpop.permute.xlu0 %333
        %335 = vrot.lane.b32.xlu0 %v331, 16
        %v336 = vpop.permute.xlu0 %335
        %vm337 = vcmp.lt.s32.totalorder %v324, 16
        %v338 = vsel %vm337, %v334, %v336
        %v339 = vsel %vm337, %v336, %v334
        %v342 = vrot.slane %v339, 4
        %v343 = vrot.slane %v338, 4
        %346 = vst [vmem:[#allocation2] sm:$0xf0] %v342
        %347 = vst [vmem:[#allocation2 + $0x8] sm:$0xf0] %v343
        %v349 = vcombine.high %v315, %v315
        %351 = vrot.lane.b32.xlu0 %v315, 15
        %v352 = vpop.permute.xlu0 %351
        %353 = vrot.lane.b32.xlu0 %v349, 15
        %v354 = vpop.permute.xlu0 %353
        %vm355 = vcmp.lt.s32.totalorder %v324, 15
        %v356 = vsel %vm355, %v352, %v354
        %v357 = vsel %vm355, %v354, %v352
        %358 = vst [vmem:[#allocation2 + $0x10] sm:$0xf] %v357
        %359 = vst [vmem:[#allocation2 + $0x18] sm:$0xf] %v356
        %360 = vrot.lane.b32.xlu0 %v301, 1
        %v361 = vpop.permute.xlu0 %360
        %362 = vrot.lane.b32.xlu0 %v317, 1
        %v363 = vpop.permute.xlu0 %362
        %vm364 = vcmp.lt.s32.totalorder %v324, 1
        %v365 = vsel %vm364, %v361, %v363
        %v366 = vsel %vm364, %v363, %v361
        %v369 = vrot.slane %v366, 4
        %v370 = vrot.slane %v365, 4
        %373 = vst [vmem:[#allocation2 + $0x10] sm:$0xf0] %v369
        %374 = vst [vmem:[#allocation2 + $0x18] sm:$0xf0] %v370
        %375 = vst [vmem:[#allocation2 + $0x20] sm:$0xf] %v277
        %376 = vst [vmem:[#allocation2 + $0x28] sm:$0xf] %v331
        %377 = vrot.lane.b32.xlu0 %v315, 127
        %v378 = vpop.permute.xlu0 %377
        %379 = vrot.lane.b32.xlu0 %v349, 127
        %v380 = vpop.permute.xlu0 %379
        %vm381 = vcmp.lt.s32.totalorder %v324, 127
        %v382 = vsel %vm381, %v378, %v380
        %v383 = vsel %vm381, %v380, %v378
        %v386 = vrot.slane %v382, 4
        %v387 = vrot.slane %v383, 4
        %390 = vst [vmem:[#allocation2 + $0x20] sm:$0xf0] %v386
        %391 = vst [vmem:[#allocation2 + $0x28] sm:$0xf0] %v387
        %392 = vrot.lane.b32.xlu0 %v301, 113
        %v393 = vpop.permute.xlu0 %392
        %394 = vrot.lane.b32.xlu0 %v317, 113
        %v395 = vpop.permute.xlu0 %394
        %vm396 = vcmp.lt.s32.totalorder %v324, 113
        %v397 = vsel %vm396, %v393, %v395
        %v398 = vsel %vm396, %v395, %v393
        %399 = vst [vmem:[#allocation2 + $0x30] sm:$0xf] %v397
        %400 = vst [vmem:[#allocation2 + $0x38] sm:$0xf] %v398
        %401 = vrot.lane.b32.xlu0 %v277, 112
        %v402 = vpop.permute.xlu0 %401
        %403 = vrot.lane.b32.xlu0 %v331, 112
        %v404 = vpop.permute.xlu0 %403
        %vm405 = vcmp.lt.s32.totalorder %v324, 112
        %v406 = vsel %vm405, %v402, %v404
        %v407 = vsel %vm405, %v404, %v402
        %v410 = vrot.slane %v406, 4
        %v411 = vrot.slane %v407, 4
        %414 = vst [vmem:[#allocation2 + $0x30] sm:$0xf0] %v410
        %415 = vst [vmem:[#allocation2 + $0x38] sm:$0xf0] %v411
        %416 = vrot.lane.b32.xlu0 %v315, 111
        %v417 = vpop.permute.xlu0 %416
        %418 = vrot.lane.b32.xlu0 %v349, 111
        %v419 = vpop.permute.xlu0 %418
        %vm420 = vcmp.lt.s32.totalorder %v324, 111
        %v421 = vsel %vm420, %v417, %v419
        %v422 = vsel %vm420, %v419, %v417
        %423 = vst [vmem:[#allocation2 + $0x40] sm:$0xf] %v421
        %424 = vst [vmem:[#allocation2 + $0x48] sm:$0xf] %v422
        %vm425 = vcmask 130048
        %426 = vst.msk [vmem:[#allocation2] sm:$0xff] %vm425, 0.0
        %vm427 = vcmask 125952
        %428 = vst.msk [vmem:[#allocation2 + $0x10] sm:$0xf] %vm427, 0.0
        %vm429 = vcmask 1048448
        %430 = vst.msk [vmem:[#allocation2 + $0x38] sm:$0xff] %vm429, 0.0
        %vm431 = vcmask 1044352
        %432 = vst.msk [vmem:[#allocation2 + $0x48] sm:$0xf] %vm431, 0.0
        %v433 = vld [vmem:[#allocation2] sm:$0xff]
        %v434 = vld [vmem:[#allocation2 + $0x8] sm:$0xff]
        %v435 = vld [vmem:[#allocation2 + $0x10] sm:$0xff]
        %v436 = vld [vmem:[#allocation2 + $0x18] sm:$0xff]
        %v437 = vld [vmem:[#allocation2 + $0x20] sm:$0xff]
        %v438 = vld [vmem:[#allocation2 + $0x28] sm:$0xff]
        %v439 = vld [vmem:[#allocation2 + $0x30] sm:$0xff]
        %v440 = vld [vmem:[#allocation2 + $0x38] sm:$0xff]
        %v441 = vld [vmem:[#allocation2 + $0x40] sm:$0xf]
        %v442 = vld [vmem:[#allocation2 + $0x48] sm:$0xf]
        %v443 = vstv %s263
        %v444 = vmul.f32 %v443, %v277
        %446 = vset.pattern.permute.xlu0 0
        %447 = vperm.xlu0 %446, %v288
        %v448 = vpop.permute.xlu0 %447
        %v450 = vunpack.c.l.s4 839922192
        %v451 = vunpack.c.0.s8 %v450
        %v452 = vlaneseq
        %v453 = vshrl.u32 %v452, 7
        %v454 = vsub.s32 %v451, %v453
        %v455 = vrot.slane %v448, %v454
        %v457 = vadd.f32 %v444, %v455
        %v459 = vcombine.high %v457, %v457
        %vm461 = vcmask 293888
        %v463 = vsel %vm461, %v281, 0
        %vm465 = vcmask 1043456
        %v467 = vsel %vm465, %v441, 0
        %v470 = vsel %vm465, %v442, 0
        %472 = vmatprep.subr.mxu0 0.0
        %473 = vmatpush1.msra.mxu0 0.0
        %474 = vmatprep.subr.mxu0 0.0
        %475 = vmatpush1.msra.mxu0 0.0
        %476 = vmatprep.subr.mxu0 0.0
        %477 = vmatpush1.msra.mxu0 0.0
        %478 = vmatprep.subr.mxu0 0.0
        %479 = vmatpush1.msra.mxu0 0.0
        %480 = vmatprep.subr.mxu0 0.0
        %481 = vmatpush1.msra.mxu0 0.0
        %482 = vmatprep.subr.mxu0 0.0
        %483 = vmatpush1.msra.mxu0 0.0
        %484 = vmatprep.subr.mxu0 0.0
        %485 = vmatpush1.msra.mxu0 0.0
        %486 = vmatprep.subr.mxu0 0.0
        %487 = vmatpush1.msra.mxu0 0.0
        %488 = vmatprep.subr.mxu0 0.0
        %489 = vmatpush1.msra.mxu0 0.0
        %490 = vmatprep.subr.mxu0 0.0
        %491 = vmatpush1.msra.mxu0 0.0
        %492 = vmatprep.subr.mxu0 0.0
        %493 = vmatpush1.msra.mxu0 0.0
        %494 = vmatprep.subr.mxu0 %v470
        %495 = vmatpush1.msra.mxu0 %v467
        %496 = vmatprep.subr.mxu0 %v440
        %497 = vmatpush1.msra.mxu0 %v439
        %498 = vmatprep.subr.mxu0 %v438
        %499 = vmatpush1.msra.mxu0 %v437
        %500 = vmatprep.subr.mxu0 %v436
        %501 = vmatpush1.msra.mxu0 %v435
        %502 = vmatprep.subr.mxu0 %v434
        %503 = vmatpush1.msra.mxu0 %v433
        %504 = vmatprep.subr.mxu0 0.0
        %505 = vmatpush2.msra.mxu0 0.0
        %506 = vmatprep.subr.mxu0 0.0
        %507 = vmatpush2.msra.mxu0 0.0
        %508 = vmatprep.subr.mxu0 0.0
        %509 = vmatpush2.msra.mxu0 0.0
        %510 = vmatprep.subr.mxu0 0.0
        %511 = vmatpush2.msra.mxu0 0.0
        %512 = vmatprep.subr.mxu0 0.0
        %513 = vmatpush2.msra.mxu0 0.0
        %514 = vmatprep.subr.mxu0 0.0
        %515 = vmatpush2.msra.mxu0 0.0
        %516 = vmatprep.subr.mxu0 0.0
        %517 = vmatpush2.msra.mxu0 0.0
        %518 = vmatprep.subr.mxu0 0.0
        %519 = vmatpush2.msra.mxu0 0.0
        %520 = vmatprep.subr.mxu0 0.0
        %521 = vmatpush2.msra.mxu0 0.0
        %522 = vmatprep.subr.mxu0 0.0
        %523 = vmatpush2.msra.mxu0 0.0
        %524 = vmatprep.subr.mxu0 0.0
        %525 = vmatpush2.msra.mxu0 0.0
        %526 = vmatprep.subr.mxu0 0.0
        %527 = vmatpush2.msra.mxu0 0.0
        %528 = vmatprep.subr.mxu0 0.0
        %529 = vmatpush2.msra.mxu0 0.0
        %530 = vmatprep.subr.mxu0 0.0
        %531 = vmatpush2.msra.mxu0 0.0
        %532 = vmatprep.subr.mxu0 0.0
        %533 = vmatpush2.msra.mxu0 0.0
        %534 = vmatprep.subr.mxu0 0.0
        %535 = vmatpush2.msra.mxu0 0.0
        %536 = vmatprep.mubr.f32.mxu0 0.0
        %537 = vmatmul.mubr.f32.gmra.mxu0 %v463
        %v538 = vpop.f32.mrf.mxu0
        %v539 = vadd.f32 %v457, %v538
        %v540 = vpop.f32.mrf.mxu0
        %v541 = vadd.f32 %v459, %v540
        %542 = vdwg.mxu0
        %v545 = vcombine.low %v539, %v541
        %547 = vst [vmem:[%s247] sm:$0xff] %v545
        %s548 = sand.u32 %s147, 1
        %s549 = scalar_lea.sflag [#allocation7], %s548
        %s550 = sand.u32 %s147, 1
        %s551 = smul.addr %s550, 8
        %s552 = scalar_lea.vmem [#allocation8], %s551
        // Predicated region
        $region45: #{tpu_custom_call.1} parent=39 // pred_check
          %p553 = pneg %p157
        $region46: #{tpu_custom_call.1} parent=39 // pred_check_branch
          %555 = sbr.rel (%p553) target = $region48
        $region47: #{tpu_custom_call.1} parent=39 // pred_region
          %s557 = ssub.s32 128, 128
          %558 = vsyncadd %s549, %s557
          %s559 = smul.addr %s29, 2
          %s560 = smul.addr %s559, 64
          %s561 = scalar_lea.hbm %s6, %s560
          %s563 = sshll.u32 %s552, 4
          %s564 = int_to_ptr.vmem [resolvable:$true] %s563
          %566 = dma.vmem_to_hbm [thread:$0]  %s564, 128, %s561, %s549
        $region48: #{tpu_custom_call.1} parent=39 // pred_fallthru
          _
      $region40: #{tpu_custom_call.1} parent=5 // pred_fallthru
        _
      %p567 = scmp.le.s32.totalorder 2, %s24
      // Predicated region
      $region49: #{tpu_custom_call.1} parent=5 // pred_check
        %p568 = pneg %p567
      $region50: #{tpu_custom_call.1} parent=5 // pred_check_branch
        %570 = sbr.rel (%p568) target = $region52
      $region51: #{tpu_custom_call.1} parent=5 // pred_region
        %s571 = ssub.s32 %s24, 2
        // Predicated region
        $region53: #{tpu_custom_call.1} parent=51 // pred_check
          %p572 = pneg %p163
        $region54: #{tpu_custom_call.1} parent=51 // pred_check_branch
          %574 = sbr.rel (%p572) target = $region56
        $region55: #{tpu_custom_call.1} parent=51 // pred_region
          %s575 = sand.u32 %s148, 1
          %s576 = scalar_lea.sflag [#allocation7], %s575
          %s577 = sand.u32 %s148, 1
          %s578 = smul.addr %s577, 8
          %s579 = scalar_lea.vmem [#allocation8], %s578
          %580 = dma.done %s576, 128
        $region56: #{tpu_custom_call.1} parent=51 // pred_fallthru
          _
      $region52: #{tpu_custom_call.1} parent=5 // pred_fallthru
        _
    $region6: #{tpu_custom_call.1} parent=1 // loop_footer
      %s28 = sadd.s32 1, %s24
    $region7: #{tpu_custom_call.1} parent=1 // loop_footer_branch
      %23 = sbr.rel target = $region3
    $region8: #{tpu_custom_call.1} parent=1 // loop_exit
      _
    %581 = vsyncpa [#allocation6], 1
    %s582 = scalar_lea.sflag [#allocation6], 1
    %583 = vsyncpa %s582, 1
    %584 = vsyncpa [#allocation7], 1
    %s585 = scalar_lea.sflag [#allocation7], 1
    %586 = vsyncpa %s585, 1

</llo_original>
